<compile_context>
chip_gen: v7x
topology: tpu7x:2x2x1
jax: 0.10.0
libtpu: 0.0.40
codegen_flags: <defaults>
</compile_context>

<pallas_src>
import functools

import numpy as np
import jax
import jax.numpy as jnp
from jax.experimental import pallas as pl
from jax.experimental.pallas import tpu as pltpu

K = 9              # Conv1d kernel_size
PAD = 4            # Conv1d padding
EPS = 1e-5         # BatchNorm1d eps
NEG_SLOPE = 0.01   # LeakyReLU negative_slope
MXU_DTYPE = jnp.float32   # set to jnp.bfloat16 on v6e/v7x for 2x MXU rate


# ----------------------------- in-kernel helpers -----------------------------

def _shift_window(x, k):
    """Column l of the result = x[:, l + k - PAD], zero outside [0, L)."""
    c, L = x.shape
    if k < PAD:
        left = jnp.zeros((c, PAD - k), jnp.float32)
        return jnp.concatenate([left, x[:, :L - (PAD - k)]], axis=-1)
    if k == PAD:
        return x
    right = jnp.zeros((c, k - PAD), jnp.float32)
    return jnp.concatenate([x[:, k - PAD:], right], axis=-1)


def _im2col_matmul(w_ref, x_list):
    """Conv1d(k=9, pad=4, bias=False) for a tile of batch elements.

    w_ref  : (Cout_p, K*Cin_p) with w[o, k*Cin_p + c] = W_torch[o, c, k]
    x_list : list of B_TILE values, each (Cin_p, L) float32
    returns: (Cout_p, B_TILE*L) float32 — ONE MXU matmul, contraction K*Cin_p.
    """
    rows = []
    for k in range(K):
        shifted = [_shift_window(x, k) for x in x_list]
        rows.append(shifted[0] if len(shifted) == 1
                    else jnp.concatenate(shifted, axis=-1))
    cols = jnp.concatenate(rows, axis=0)                       # (K*Cin_p, B*L)
    return jnp.dot(w_ref[...].astype(MXU_DTYPE), cols.astype(MXU_DTYPE),
                   preferred_element_type=jnp.float32)


def _bn_scale_shift(st_ref, g_ref, b_ref, inv_cnt):
    """Fold BatchNorm (batch statistics) into per-channel scale/shift.

    Note: single-pass E[x^2]-mean^2 in f32; fine at these magnitudes/sizes.
    """
    mean = st_ref[:, 0:1] * inv_cnt
    var = st_ref[:, 1:2] * inv_cnt - mean * mean
    scale = g_ref[...] * jax.lax.rsqrt(var + EPS)
    shift = b_ref[...] - mean * scale
    return scale, shift


# --------------------------------- kernels -----------------------------------

def _conv_stats_kernel(x_ref, w_ref, y_ref, stats_ref):
    """Stage-1 conv; writes raw conv output and accumulates sum / sumsq."""
    b_tile, _, L = x_ref.shape

    @pl.when(pl.program_id(0) == 0)
    def _():
        stats_ref[...] = jnp.zeros_like(stats_ref)

    out = _im2col_matmul(w_ref, [x_ref[b].astype(jnp.float32)
                                 for b in range(b_tile)])      # (Cout_p, B*L)
    s = jnp.sum(out, axis=1, keepdims=True)
    ss = jnp.sum(out * out, axis=1, keepdims=True)
    stats_ref[...] += jnp.concatenate([s, ss], axis=1)         # one (C,2) write
    for b in range(b_tile):
        y_ref[b] = out[:, b * L:(b + 1) * L]


def _affine_conv_stats_kernel(y1_ref, st1_ref, g1_ref, b1_ref, w_ref,
                              y2_ref, st2_ref, *, inv_cnt):
    """Fused: folded-BN1 affine + LeakyReLU, then stage-2 conv + stats."""
    b_tile, _, L = y1_ref.shape

    @pl.when(pl.program_id(0) == 0)
    def _():
        st2_ref[...] = jnp.zeros_like(st2_ref)

    scale, shift = _bn_scale_shift(st1_ref, g1_ref, b1_ref, inv_cnt)

    acts = []
    for b in range(b_tile):
        a = y1_ref[b] * scale + shift
        acts.append(jnp.where(a > 0, a, NEG_SLOPE * a))

    out = _im2col_matmul(w_ref, acts)                          # (Cout_p, B*L)
    s = jnp.sum(out, axis=1, keepdims=True)
    ss = jnp.sum(out * out, axis=1, keepdims=True)
    st2_ref[...] += jnp.concatenate([s, ss], axis=1)
    for b in range(b_tile):
        y2_ref[b] = out[:, b * L:(b + 1) * L]


def _affine_lrelu_kernel(y_ref, st_ref, g_ref, b_ref, o_ref, *, inv_cnt):
    """Final folded-BN2 affine + LeakyReLU (pure elementwise, megacore parallel)."""
    b_tile = y_ref.shape[0]
    scale, shift = _bn_scale_shift(st_ref, g_ref, b_ref, inv_cnt)
    for b in range(b_tile):
        a = y_ref[b] * scale + shift
        o_ref[b] = jnp.where(a > 0, a, NEG_SLOPE * a)


# ------------------------------- wrappers -------------------------------------

def _pad8(c):
    return -(-c // 8) * 8


def _pick_batch_tile(n, L, max_lanes=512, max_tile=8):
    """Largest divisor of n with tile*L <= max_lanes (keeps vreg pressure sane)."""
    bt = 1
    for d in range(1, n + 1):
        if n % d == 0 and d * L <= max_lanes and d <= max_tile:
            bt = d
    return bt


def _prep_weight(w, cin_p, cout_p):
    """(Cout, Cin, K) torch layout -> (Cout_p, K*Cin_p), row order k*Cin_p + c."""
    cout, cin, kk = w.shape
    w = jnp.pad(jnp.asarray(w, jnp.float32),
                ((0, cout_p - cout), (0, cin_p - cin), (0, 0)))
    return jnp.transpose(w, (0, 2, 1)).reshape(cout_p, kk * cin_p)


def _pad_col(v, cp):
    v = jnp.asarray(v, jnp.float32)
    if v.shape[0] < cp:
        v = jnp.pad(v, (0, cp - v.shape[0]))
    return v.reshape(cp, 1)


def double_conv(x, params):
    """DoubleConv forward. x: (N, Cin, L) NCL float32."""
    N, cin, L = x.shape
    w1, g1, b1 = params["w1"], params["g1"], params["b1"]
    w2, g2, b2 = params["w2"], params["g2"], params["b2"]
    cmid, cout = w1.shape[0], w2.shape[0]
    cin_p, cmid_p, cout_p = _pad8(cin), _pad8(cmid), _pad8(cout)

    bt = _pick_batch_tile(N, L)
    grid = (N // bt,)
    inv_cnt = 1.0 / float(N * L)            # trace-time constant (no XLA glue)

    xp = jnp.asarray(x, jnp.float32)
    if cin_p > cin:
        xp = jnp.pad(xp, ((0, 0), (0, cin_p - cin), (0, 0)))

    w1_2d = _prep_weight(w1, cin_p, cmid_p)
    w2_2d = _prep_weight(w2, cmid_p, cout_p)
    g1p, b1p = _pad_col(g1, cmid_p), _pad_col(b1, cmid_p)
    g2p, b2p = _pad_col(g2, cout_p), _pad_col(b2, cout_p)

    # Kernel A: conv1 + BN1 batch statistics (resident (C,2) accumulator over N).
    y1, st1 = pl.pallas_call(
        _conv_stats_kernel,
        out_shape=(jax.ShapeDtypeStruct((N, cmid_p, L), jnp.float32),
                   jax.ShapeDtypeStruct((cmid_p, 2), jnp.float32)),
        grid=grid,
        in_specs=[pl.BlockSpec((bt, cin_p, L), lambda n: (n, 0, 0)),
                  pl.BlockSpec((cmid_p, K * cin_p), lambda n: (0, 0))],
        out_specs=(pl.BlockSpec((bt, cmid_p, L), lambda n: (n, 0, 0)),
                   pl.BlockSpec((cmid_p, 2), lambda n: (0, 0))),
        compiler_params=pltpu.CompilerParams(
            dimension_semantics=("arbitrary",)),
    )(xp, w1_2d)

    # Kernel B: folded-BN1 affine + LeakyReLU + conv2 + BN2 statistics (fused).
    y2, st2 = pl.pallas_call(
        functools.partial(_affine_conv_stats_kernel, inv_cnt=inv_cnt),
        out_shape=(jax.ShapeDtypeStruct((N, cout_p, L), jnp.float32),
                   jax.ShapeDtypeStruct((cout_p, 2), jnp.float32)),
        grid=grid,
        in_specs=[pl.BlockSpec((bt, cmid_p, L), lambda n: (n, 0, 0)),
                  pl.BlockSpec((cmid_p, 2), lambda n: (0, 0)),
                  pl.BlockSpec((cmid_p, 1), lambda n: (0, 0)),
                  pl.BlockSpec((cmid_p, 1), lambda n: (0, 0)),
                  pl.BlockSpec((cout_p, K * cmid_p), lambda n: (0, 0))],
        out_specs=(pl.BlockSpec((bt, cout_p, L), lambda n: (n, 0, 0)),
                   pl.BlockSpec((cout_p, 2), lambda n: (0, 0))),
        compiler_params=pltpu.CompilerParams(
            dimension_semantics=("arbitrary",)),
    )(y1, st1, g1p, b1p, w2_2d)

    # Kernel C: folded-BN2 affine + LeakyReLU (batch axis "parallel" -> megacore).
    y = pl.pallas_call(
        functools.partial(_affine_lrelu_kernel, inv_cnt=inv_cnt),
        out_shape=jax.ShapeDtypeStruct((N, cout_p, L), jnp.float32),
        grid=grid,
        in_specs=[pl.BlockSpec((bt, cout_p, L), lambda n: (n, 0, 0)),
                  pl.BlockSpec((cout_p, 2), lambda n: (0, 0)),
                  pl.BlockSpec((cout_p, 1), lambda n: (0, 0)),
                  pl.BlockSpec((cout_p, 1), lambda n: (0, 0))],
        out_specs=pl.BlockSpec((bt, cout_p, L), lambda n: (n, 0, 0)),
        compiler_params=pltpu.CompilerParams(
            dimension_semantics=("parallel",)),
    )(y2, st2, g2p, b2p)

    return y[:, :cout, :]


# ---------------- upsample / pad / concat glue (plain JAX) --------------------

def _upsample_matrix_np(lin, lout):
    """(lin, lout) linear-interp matrix, align_corners=True; trace-time constant."""
    if lin == 1:
        return np.ones((1, lout), np.float32)
    src = np.arange(lout, dtype=np.float64) * ((lin - 1) / (lout - 1))
    i0 = np.clip(np.floor(src).astype(np.int64), 0, lin - 2)
    frac = (src - i0).astype(np.float32)
    m = np.zeros((lin, lout), np.float32)
    cols = np.arange(lout)
    m[i0, cols] += 1.0 - frac
    m[i0 + 1, cols] += frac
    return m


def _upsample_linear_x4(x):
    """nn.Upsample(scale_factor=4, mode='linear', align_corners=True)."""
    _, _, lin = x.shape
    m = jnp.asarray(_upsample_matrix_np(lin, 4 * lin), x.dtype)
    return jnp.einsum("ncl,lm->ncm", x, m)      # tiny static-weight matmul, no gather


@jax.jit
def up_forward(x1, x2, params):
    """`Up.forward(x1, x2)` (bilinear=True). x1, x2: (N, C, L) NCL."""
    x1u = _upsample_linear_x4(x1.astype(jnp.float32))
    diff = x2.shape[2] - x1u.shape[2]
    x1p = jnp.pad(x1u, ((0, 0), (0, 0), (diff // 2, diff - diff // 2)))
    x = jnp.concatenate([x2.astype(jnp.float32), x1p], axis=1)
    return double_conv(x, params)


def init_params(key, in_channels, out_channels, mid_channels=None):
    """Params matching a freshly constructed torch DoubleConv (BN: gamma=1, beta=0)."""
    if not mid_channels:
        mid_channels = out_channels
    k1, k2 = jax.random.split(key)
    bnd1 = 1.0 / (in_channels * K) ** 0.5
    bnd2 = 1.0 / (mid_channels * K) ** 0.5
    return {
        "w1": jax.random.uniform(k1, (mid_channels, in_channels, K),
                                 jnp.float32, -bnd1, bnd1),   # PyTorch (Cout,Cin,K)
        "g1": jnp.ones((mid_channels,), jnp.float32),
        "b1": jnp.zeros((mid_channels,), jnp.float32),
        "w2": jax.random.uniform(k2, (out_channels, mid_channels, K),
                                 jnp.float32, -bnd2, bnd2),
        "g2": jnp.ones((out_channels,), jnp.float32),
        "b2": jnp.zeros((out_channels,), jnp.float32),
    }


# --------------------------- plain-JAX reference -----------------------------

def _ref_upsample(x):
    n, c, lin = x.shape
    lout = 4 * lin
    if lin == 1:
        return jnp.broadcast_to(x, (n, c, lout))
    src = jnp.arange(lout, dtype=jnp.float32) * ((lin - 1) / (lout - 1))
    i0 = jnp.clip(jnp.floor(src).astype(jnp.int32), 0, lin - 2)
    frac = src - i0.astype(jnp.float32)
    return x[:, :, i0] * (1.0 - frac) + x[:, :, i0 + 1] * frac


def _ref_stage(x, w, gamma, beta):
    y = jax.lax.conv_general_dilated(
        x, w, window_strides=(1,), padding=[(PAD, PAD)],
        dimension_numbers=("NCH", "OIH", "NCH"))
    mean = y.mean(axis=(0, 2), keepdims=True)
    var = y.var(axis=(0, 2), keepdims=True)            # biased, BN training mode
    yn = (y - mean) * jax.lax.rsqrt(var + EPS)
    yn = yn * gamma[None, :, None] + beta[None, :, None]
    return jnp.where(yn > 0, yn, NEG_SLOPE * yn)


def _ref_up(x1, x2, params):
    x1u = _ref_upsample(x1)
    diff = x2.shape[2] - x1u.shape[2]
    x1p = jnp.pad(x1u, ((0, 0), (0, 0), (diff // 2, diff - diff // 2)))
    x = jnp.concatenate([x2, x1p], axis=1)
    y = _ref_stage(x, params["w1"], params["g1"], params["b1"])
    return _ref_stage(y, params["w2"], params["g2"], params["b2"])


# --------------------------------- demo --------------------------------------

if __name__ == "__main__":
    key = jax.random.PRNGKey(0)
    kx1, kx2, kp = jax.random.split(key, 3)

    # Up(in_channels=8, out_channels=8, bilinear=True):
    #   x1: (2, 4, 4)  -> upsampled x4 to length 16
    #   x2: (2, 4, 16) skip connection; concat -> (2, 8, 16); output (2, 8, 16)
    N, C_half, L1, L2 = 2, 4, 4, 16
    in_channels, out_channels = 2 * C_half, 8
    x1 = jax.random.normal(kx1, (N, C_half, L1), jnp.float32)
    x2 = jax.random.normal(kx2, (N, C_half, L2), jnp.float32)
    params = init_params(kp, in_channels, out_channels,
                         mid_channels=in_channels // 2)

    out = jax.block_until_ready(up_forward(x1, x2, params))
    assert out.shape == (N, out_channels, L2), out.shape

    ref = jax.block_until_ready(_ref_up(x1, x2, params))
    assert jnp.allclose(out, ref, atol=5e-3, rtol=5e-3), float(
        jnp.max(jnp.abs(out - ref)))

    print("KERNEL_OK")
</pallas_src>

<mosaic_0001>
module attributes {stable_mosaic.version = 11 : i64} {
  func.func @_conv_stats_kernel(%arg0: i32, %arg1: memref<2x8x16xf32, #tpu.memory_space<vmem>>, %arg2: memref<8x72xf32, #tpu.memory_space<vmem>>, %arg3: memref<2x8x16xf32, #tpu.memory_space<vmem>>, %arg4: memref<8x2xf32, #tpu.memory_space<vmem>>) attributes {dimension_semantics = [#tpu.dimension_semantics<arbitrary>], iteration_bounds = array<i64: 1>, scalar_prefetch = 0 : i64, scratch_operands = 0 : i64, tpu.core_type = #tpu.core_type<tc>, window_params = [{transform_indices = @transform_0, window_bounds = array<i64: 2, 8, 16>}, {pipeline_mode = #tpu.pipeline_mode<synchronous>, transform_indices = @transform_1, window_bounds = array<i64: 8, 72>}, {transform_indices = @transform_2, window_bounds = array<i64: 2, 8, 16>}, {pipeline_mode = #tpu.pipeline_mode<synchronous>, transform_indices = @transform_3, window_bounds = array<i64: 8, 2>}]} {
    %c0_i32 = arith.constant 0 : i32
    %0 = arith.cmpi eq, %arg0, %c0_i32 : i32
    %1 = arith.extui %0 : i1 to i32
    %c0_i32_0 = arith.constant 0 : i32
    %2 = arith.cmpi ne, %1, %c0_i32_0 : i32
    scf.if %2 {
      %cst_35 = arith.constant 0.000000e+00 : f32
      %84 = vector.broadcast %cst_35 : f32 to vector<8x2xf32>
      %c0_36 = arith.constant 0 : index
      %c0_37 = arith.constant 0 : index
      %85 = vector.load %arg4[%c0_36, %c0_37] : memref<8x2xf32, #tpu.memory_space<vmem>>, vector<8x2xf32>
      tpu.vector_store %arg4[%c0_36, %c0_37], %84 {strides = array<i32>} : memref<8x2xf32, #tpu.memory_space<vmem>>, vector<8x2xf32>,
    } else {
    }
    %c0 = arith.constant 0 : index
    %c0_1 = arith.constant 0 : index
    %c0_2 = arith.constant 0 : index
    %3 = vector.load %arg1[%c0, %c0_1, %c0_2] : memref<2x8x16xf32, #tpu.memory_space<vmem>>, vector<1x8x16xf32>
    %4 = vector.shape_cast %3 : vector<1x8x16xf32> to vector<8x16xf32>
    %c1 = arith.constant 1 : index
    %c0_3 = arith.constant 0 : index
    %c0_4 = arith.constant 0 : index
    %5 = vector.load %arg1[%c1, %c0_3, %c0_4] : memref<2x8x16xf32, #tpu.memory_space<vmem>>, vector<1x8x16xf32>
    %6 = vector.shape_cast %5 : vector<1x8x16xf32> to vector<8x16xf32>
    %cst = arith.constant 0.000000e+00 : f32
    %7 = vector.broadcast %cst : f32 to vector<8x4xf32>
    %8 = vector.extract_strided_slice %4 {offsets = [0, 0], sizes = [8, 12], strides = [1, 1]} : vector<8x16xf32> to vector<8x12xf32>
    %9 = tpu.concatenate %7, %8 in 1 : vector<8x4xf32>, vector<8x12xf32> -> vector<8x16xf32>
    %cst_5 = arith.constant 0.000000e+00 : f32
    %10 = vector.broadcast %cst_5 : f32 to vector<8x4xf32>
    %11 = vector.extract_strided_slice %6 {offsets = [0, 0], sizes = [8, 12], strides = [1, 1]} : vector<8x16xf32> to vector<8x12xf32>
    %12 = tpu.concatenate %10, %11 in 1 : vector<8x4xf32>, vector<8x12xf32> -> vector<8x16xf32>
    %13 = tpu.concatenate %9, %12 in 1 : vector<8x16xf32>, vector<8x16xf32> -> vector<8x32xf32>
    %cst_6 = arith.constant 0.000000e+00 : f32
    %14 = vector.broadcast %cst_6 : f32 to vector<8x3xf32>
    %15 = vector.extract_strided_slice %4 {offsets = [0, 0], sizes = [8, 13], strides = [1, 1]} : vector<8x16xf32> to vector<8x13xf32>
    %16 = tpu.concatenate %14, %15 in 1 : vector<8x3xf32>, vector<8x13xf32> -> vector<8x16xf32>
    %cst_7 = arith.constant 0.000000e+00 : f32
    %17 = vector.broadcast %cst_7 : f32 to vector<8x3xf32>
    %18 = vector.extract_strided_slice %6 {offsets = [0, 0], sizes = [8, 13], strides = [1, 1]} : vector<8x16xf32> to vector<8x13xf32>
    %19 = tpu.concatenate %17, %18 in 1 : vector<8x3xf32>, vector<8x13xf32> -> vector<8x16xf32>
    %20 = tpu.concatenate %16, %19 in 1 : vector<8x16xf32>, vector<8x16xf32> -> vector<8x32xf32>
    %cst_8 = arith.constant 0.000000e+00 : f32
    %21 = vector.broadcast %cst_8 : f32 to vector<8x2xf32>
    %22 = vector.extract_strided_slice %4 {offsets = [0, 0], sizes = [8, 14], strides = [1, 1]} : vector<8x16xf32> to vector<8x14xf32>
    %23 = tpu.concatenate %21, %22 in 1 : vector<8x2xf32>, vector<8x14xf32> -> vector<8x16xf32>
    %cst_9 = arith.constant 0.000000e+00 : f32
    %24 = vector.broadcast %cst_9 : f32 to vector<8x2xf32>
    %25 = vector.extract_strided_slice %6 {offsets = [0, 0], sizes = [8, 14], strides = [1, 1]} : vector<8x16xf32> to vector<8x14xf32>
    %26 = tpu.concatenate %24, %25 in 1 : vector<8x2xf32>, vector<8x14xf32> -> vector<8x16xf32>
    %27 = tpu.concatenate %23, %26 in 1 : vector<8x16xf32>, vector<8x16xf32> -> vector<8x32xf32>
    %cst_10 = arith.constant 0.000000e+00 : f32
    %28 = vector.broadcast %cst_10 : f32 to vector<8x1xf32>
    %29 = vector.extract_strided_slice %4 {offsets = [0, 0], sizes = [8, 15], strides = [1, 1]} : vector<8x16xf32> to vector<8x15xf32>
    %30 = tpu.concatenate %28, %29 in 1 : vector<8x1xf32>, vector<8x15xf32> -> vector<8x16xf32>
    %cst_11 = arith.constant 0.000000e+00 : f32
    %31 = vector.broadcast %cst_11 : f32 to vector<8x1xf32>
    %32 = vector.extract_strided_slice %6 {offsets = [0, 0], sizes = [8, 15], strides = [1, 1]} : vector<8x16xf32> to vector<8x15xf32>
    %33 = tpu.concatenate %31, %32 in 1 : vector<8x1xf32>, vector<8x15xf32> -> vector<8x16xf32>
    %34 = tpu.concatenate %30, %33 in 1 : vector<8x16xf32>, vector<8x16xf32> -> vector<8x32xf32>
    %35 = tpu.concatenate %4, %6 in 1 : vector<8x16xf32>, vector<8x16xf32> -> vector<8x32xf32>
    %cst_12 = arith.constant 0.000000e+00 : f32
    %36 = vector.broadcast %cst_12 : f32 to vector<8x1xf32>
    %37 = vector.extract_strided_slice %4 {offsets = [0, 1], sizes = [8, 15], strides = [1, 1]} : vector<8x16xf32> to vector<8x15xf32>
    %38 = tpu.concatenate %37, %36 in 1 : vector<8x15xf32>, vector<8x1xf32> -> vector<8x16xf32>
    %cst_13 = arith.constant 0.000000e+00 : f32
    %39 = vector.broadcast %cst_13 : f32 to vector<8x1xf32>
    %40 = vector.extract_strided_slice %6 {offsets = [0, 1], sizes = [8, 15], strides = [1, 1]} : vector<8x16xf32> to vector<8x15xf32>
    %41 = tpu.concatenate %40, %39 in 1 : vector<8x15xf32>, vector<8x1xf32> -> vector<8x16xf32>
    %42 = tpu.concatenate %38, %41 in 1 : vector<8x16xf32>, vector<8x16xf32> -> vector<8x32xf32>
    %cst_14 = arith.constant 0.000000e+00 : f32
    %43 = vector.broadcast %cst_14 : f32 to vector<8x2xf32>
    %44 = vector.extract_strided_slice %4 {offsets = [0, 2], sizes = [8, 14], strides = [1, 1]} : vector<8x16xf32> to vector<8x14xf32>
    %45 = tpu.concatenate %44, %43 in 1 : vector<8x14xf32>, vector<8x2xf32> -> vector<8x16xf32>
    %cst_15 = arith.constant 0.000000e+00 : f32
    %46 = vector.broadcast %cst_15 : f32 to vector<8x2xf32>
    %47 = vector.extract_strided_slice %6 {offsets = [0, 2], sizes = [8, 14], strides = [1, 1]} : vector<8x16xf32> to vector<8x14xf32>
    %48 = tpu.concatenate %47, %46 in 1 : vector<8x14xf32>, vector<8x2xf32> -> vector<8x16xf32>
    %49 = tpu.concatenate %45, %48 in 1 : vector<8x16xf32>, vector<8x16xf32> -> vector<8x32xf32>
    %cst_16 = arith.constant 0.000000e+00 : f32
    %50 = vector.broadcast %cst_16 : f32 to vector<8x3xf32>
    %51 = vector.extract_strided_slice %4 {offsets = [0, 3], sizes = [8, 13], strides = [1, 1]} : vector<8x16xf32> to vector<8x13xf32>
    %52 = tpu.concatenate %51, %50 in 1 : vector<8x13xf32>, vector<8x3xf32> -> vector<8x16xf32>
    %cst_17 = arith.constant 0.000000e+00 : f32
    %53 = vector.broadcast %cst_17 : f32 to vector<8x3xf32>
    %54 = vector.extract_strided_slice %6 {offsets = [0, 3], sizes = [8, 13], strides = [1, 1]} : vector<8x16xf32> to vector<8x13xf32>
    %55 = tpu.concatenate %54, %53 in 1 : vector<8x13xf32>, vector<8x3xf32> -> vector<8x16xf32>
    %56 = tpu.concatenate %52, %55 in 1 : vector<8x16xf32>, vector<8x16xf32> -> vector<8x32xf32>
    %cst_18 = arith.constant 0.000000e+00 : f32
    %57 = vector.broadcast %cst_18 : f32 to vector<8x4xf32>
    %58 = vector.extract_strided_slice %4 {offsets = [0, 4], sizes = [8, 12], strides = [1, 1]} : vector<8x16xf32> to vector<8x12xf32>
    %59 = tpu.concatenate %58, %57 in 1 : vector<8x12xf32>, vector<8x4xf32> -> vector<8x16xf32>
    %cst_19 = arith.constant 0.000000e+00 : f32
    %60 = vector.broadcast %cst_19 : f32 to vector<8x4xf32>
    %61 = vector.extract_strided_slice %6 {offsets = [0, 4], sizes = [8, 12], strides = [1, 1]} : vector<8x16xf32> to vector<8x12xf32>
    %62 = tpu.concatenate %61, %60 in 1 : vector<8x12xf32>, vector<8x4xf32> -> vector<8x16xf32>
    %63 = tpu.concatenate %59, %62 in 1 : vector<8x16xf32>, vector<8x16xf32> -> vector<8x32xf32>
    %64 = tpu.concatenate %13, %20, %27, %34, %35, %42, %49, %56, %63 in 0 : vector<8x32xf32>, vector<8x32xf32>, vector<8x32xf32>, vector<8x32xf32>, vector<8x32xf32>, vector<8x32xf32>, vector<8x32xf32>, vector<8x32xf32>, vector<8x32xf32> -> vector<72x32xf32>
    %c0_20 = arith.constant 0 : index
    %c0_21 = arith.constant 0 : index
    %65 = vector.load %arg2[%c0_20, %c0_21] : memref<8x72xf32, #tpu.memory_space<vmem>>, vector<8x72xf32>
    %cst_22 = arith.constant dense<0.000000e+00> : vector<8x32xf32>
    %66 = tpu.matmul %65, %64, %cst_22 {dimension_numbers = #tpu.dot_dimension_numbers<[1], [0], [0], [1], [0, 0, 1, 1], [], []>} : vector<8x72xf32>, vector<72x32xf32>, vector<8x32xf32> -> vector<8x32xf32>
    %cst_23 = arith.constant dense<0.000000e+00> : vector<8xf32>
    %67 = vector.multi_reduction <add>, %66, %cst_23 [1] : vector<8x32xf32> to vector<8xf32>
    %68 = vector.shape_cast %67 : vector<8xf32> to vector<8x1xf32>
    %69 = arith.mulf %66, %66 : vector<8x32xf32>
    %cst_24 = arith.constant dense<0.000000e+00> : vector<8xf32>
    %70 = vector.multi_reduction <add>, %69, %cst_24 [1] : vector<8x32xf32> to vector<8xf32>
    %71 = vector.shape_cast %70 : vector<8xf32> to vector<8x1xf32>
    %c0_25 = arith.constant 0 : index
    %c0_26 = arith.constant 0 : index
    %72 = vector.load %arg4[%c0_25, %c0_26] : memref<8x2xf32, #tpu.memory_space<vmem>>, vector<8x2xf32>
    %73 = tpu.concatenate %68, %71 in 1 : vector<8x1xf32>, vector<8x1xf32> -> vector<8x2xf32>
    %74 = arith.addf %72, %73 : vector<8x2xf32>
    %c0_27 = arith.constant 0 : index
    %c0_28 = arith.constant 0 : index
    %75 = vector.load %arg4[%c0_27, %c0_28] : memref<8x2xf32, #tpu.memory_space<vmem>>, vector<8x2xf32>
    tpu.vector_store %arg4[%c0_27, %c0_28], %74 {strides = array<i32>} : memref<8x2xf32, #tpu.memory_space<vmem>>, vector<8x2xf32>,
    %76 = vector.extract_strided_slice %66 {offsets = [0, 0], sizes = [8, 16], strides = [1, 1]} : vector<8x32xf32> to vector<8x16xf32>
    %c0_29 = arith.constant 0 : index
    %c0_30 = arith.constant 0 : index
    %c0_31 = arith.constant 0 : index
    %77 = vector.load %arg3[%c0_29, %c0_30, %c0_31] : memref<2x8x16xf32, #tpu.memory_space<vmem>>, vector<1x8x16xf32>
    %78 = vector.shape_cast %77 : vector<1x8x16xf32> to vector<8x16xf32>
    %79 = vector.shape_cast %76 : vector<8x16xf32> to vector<1x8x16xf32>
    tpu.vector_store %arg3[%c0_29, %c0_30, %c0_31], %79 {strides = array<i32>} : memref<2x8x16xf32, #tpu.memory_space<vmem>>, vector<1x8x16xf32>,
    %80 = vector.extract_strided_slice %66 {offsets = [0, 16], sizes = [8, 16], strides = [1, 1]} : vector<8x32xf32> to vector<8x16xf32>
    %c1_32 = arith.constant 1 : index
    %c0_33 = arith.constant 0 : index
    %c0_34 = arith.constant 0 : index
    %81 = vector.load %arg3[%c1_32, %c0_33, %c0_34] : memref<2x8x16xf32, #tpu.memory_space<vmem>>, vector<1x8x16xf32>
    %82 = vector.shape_cast %81 : vector<1x8x16xf32> to vector<8x16xf32>
    %83 = vector.shape_cast %80 : vector<8x16xf32> to vector<1x8x16xf32>
    tpu.vector_store %arg3[%c1_32, %c0_33, %c0_34], %83 {strides = array<i32>} : memref<2x8x16xf32, #tpu.memory_space<vmem>>, vector<1x8x16xf32>,
    return
  }
  func.func @transform_0(%arg0: i32) -> (i32, i32, i32) {
    %c0_i32 = arith.constant 0 : i32
    %c0_i32_0 = arith.constant 0 : i32
    %c0_i32_1 = arith.constant 0 : i32
    return %arg0, %c0_i32, %c0_i32_0 : i32, i32, i32
  }
  func.func @transform_1(%arg0: i32) -> (i32, i32) {
    %c0_i32 = arith.constant 0 : i32
    %c0_i32_0 = arith.constant 0 : i32
    %c0_i32_1 = arith.constant 0 : i32
    return %c0_i32, %c0_i32_0 : i32, i32
  }
  func.func @transform_2(%arg0: i32) -> (i32, i32, i32) {
    %c0_i32 = arith.constant 0 : i32
    %c0_i32_0 = arith.constant 0 : i32
    %c0_i32_1 = arith.constant 0 : i32
    return %arg0, %c0_i32, %c0_i32_0 : i32, i32, i32
  }
  func.func @transform_3(%arg0: i32) -> (i32, i32) {
    %c0_i32 = arith.constant 0 : i32
    %c0_i32_0 = arith.constant 0 : i32
    %c0_i32_1 = arith.constant 0 : i32
    return %c0_i32, %c0_i32_0 : i32, i32
  }
}

module attributes {stable_mosaic.version = 11 : i64} {
  func.func @_affine_conv_stats_kernel(%arg0: i32, %arg1: memref<2x8x16xf32, #tpu.memory_space<vmem>>, %arg2: memref<8x2xf32, #tpu.memory_space<vmem>>, %arg3: memref<8x1xf32, #tpu.memory_space<vmem>>, %arg4: memref<8x1xf32, #tpu.memory_space<vmem>>, %arg5: memref<8x72xf32, #tpu.memory_space<vmem>>, %arg6: memref<2x8x16xf32, #tpu.memory_space<vmem>>, %arg7: memref<8x2xf32, #tpu.memory_space<vmem>>) attributes {dimension_semantics = [#tpu.dimension_semantics<arbitrary>], iteration_bounds = array<i64: 1>, scalar_prefetch = 0 : i64, scratch_operands = 0 : i64, tpu.core_type = #tpu.core_type<tc>, window_params = [{transform_indices = @transform_0, window_bounds = array<i64: 2, 8, 16>}, {pipeline_mode = #tpu.pipeline_mode<synchronous>, transform_indices = @transform_1, window_bounds = array<i64: 8, 2>}, {pipeline_mode = #tpu.pipeline_mode<synchronous>, transform_indices = @transform_2, window_bounds = array<i64: 8, 1>}, {pipeline_mode = #tpu.pipeline_mode<synchronous>, transform_indices = @transform_3, window_bounds = array<i64: 8, 1>}, {pipeline_mode = #tpu.pipeline_mode<synchronous>, transform_indices = @transform_4, window_bounds = array<i64: 8, 72>}, {transform_indices = @transform_5, window_bounds = array<i64: 2, 8, 16>}, {pipeline_mode = #tpu.pipeline_mode<synchronous>, transform_indices = @transform_6, window_bounds = array<i64: 8, 2>}]} {
    %c0_i32 = arith.constant 0 : i32
    %0 = arith.cmpi eq, %arg0, %c0_i32 : i32
    %1 = arith.extui %0 : i1 to i32
    %c0_i32_0 = arith.constant 0 : i32
    %2 = arith.cmpi ne, %1, %c0_i32_0 : i32
    scf.if %2 {
      %cst_50 = arith.constant 0.000000e+00 : f32
      %118 = vector.broadcast %cst_50 : f32 to vector<8x2xf32>
      %c0_51 = arith.constant 0 : index
      %c0_52 = arith.constant 0 : index
      %119 = vector.load %arg7[%c0_51, %c0_52] : memref<8x2xf32, #tpu.memory_space<vmem>>, vector<8x2xf32>
      tpu.vector_store %arg7[%c0_51, %c0_52], %118 {strides = array<i32>} : memref<8x2xf32, #tpu.memory_space<vmem>>, vector<8x2xf32>,
    } else {
    }
    %c0 = arith.constant 0 : index
    %c0_1 = arith.constant 0 : index
    %3 = vector.load %arg2[%c0, %c0_1] : memref<8x2xf32, #tpu.memory_space<vmem>>, vector<8x1xf32>
    %cst = arith.constant 3.125000e-02 : f32
    %4 = vector.broadcast %cst : f32 to vector<8x1xf32>
    %5 = arith.mulf %3, %4 : vector<8x1xf32>
    %c0_2 = arith.constant 0 : index
    %c1 = arith.constant 1 : index
    %6 = vector.load %arg2[%c0_2, %c1] : memref<8x2xf32, #tpu.memory_space<vmem>>, vector<8x1xf32>
    %cst_3 = arith.constant 3.125000e-02 : f32
    %7 = vector.broadcast %cst_3 : f32 to vector<8x1xf32>
    %8 = arith.mulf %6, %7 : vector<8x1xf32>
    %9 = arith.mulf %5, %5 : vector<8x1xf32>
    %10 = arith.subf %8, %9 : vector<8x1xf32>
    %c0_4 = arith.constant 0 : index
    %c0_5 = arith.constant 0 : index
    %11 = vector.load %arg3[%c0_4, %c0_5] : memref<8x1xf32, #tpu.memory_space<vmem>>, vector<8x1xf32>
    %cst_6 = arith.constant 9.99999974E-6 : f32
    %12 = vector.broadcast %cst_6 : f32 to vector<8x1xf32>
    %13 = arith.addf %10, %12 : vector<8x1xf32>
    %14 = math.rsqrt %13 : vector<8x1xf32>
    %15 = arith.mulf %11, %14 : vector<8x1xf32>
    %c0_7 = arith.constant 0 : index
    %c0_8 = arith.constant 0 : index
    %16 = vector.load %arg4[%c0_7, %c0_8] : memref<8x1xf32, #tpu.memory_space<vmem>>, vector<8x1xf32>
    %17 = arith.mulf %5, %15 : vector<8x1xf32>
    %18 = arith.subf %16, %17 : vector<8x1xf32>
    %c0_9 = arith.constant 0 : index
    %c0_10 = arith.constant 0 : index
    %c0_11 = arith.constant 0 : index
    %19 = vector.load %arg1[%c0_9, %c0_10, %c0_11] : memref<2x8x16xf32, #tpu.memory_space<vmem>>, vector<1x8x16xf32>
    %20 = vector.shape_cast %19 : vector<1x8x16xf32> to vector<8x16xf32>
    %21 = vector.broadcast %15 : vector<8x1xf32> to vector<8x16xf32>
    %22 = arith.mulf %20, %21 : vector<8x16xf32>
    %23 = vector.broadcast %18 : vector<8x1xf32> to vector<8x16xf32>
    %24 = arith.addf %22, %23 : vector<8x16xf32>
    %cst_12 = arith.constant 0.000000e+00 : f32
    %25 = vector.broadcast %cst_12 : f32 to vector<8x16xf32>
    %26 = arith.cmpf ogt, %24, %25 : vector<8x16xf32>
    %cst_13 = arith.constant 0.00999999977 : f32
    %27 = vector.broadcast %cst_13 : f32 to vector<8x16xf32>
    %28 = arith.mulf %27, %24 : vector<8x16xf32>
    %29 = arith.select %26, %24, %28 : vector<8x16xi1>, vector<8x16xf32>
    %c1_14 = arith.constant 1 : index
    %c0_15 = arith.constant 0 : index
    %c0_16 = arith.constant 0 : index
    %30 = vector.load %arg1[%c1_14, %c0_15, %c0_16] : memref<2x8x16xf32, #tpu.memory_space<vmem>>, vector<1x8x16xf32>
    %31 = vector.shape_cast %30 : vector<1x8x16xf32> to vector<8x16xf32>
    %32 = vector.broadcast %15 : vector<8x1xf32> to vector<8x16xf32>
    %33 = arith.mulf %31, %32 : vector<8x16xf32>
    %34 = vector.broadcast %18 : vector<8x1xf32> to vector<8x16xf32>
    %35 = arith.addf %33, %34 : vector<8x16xf32>
    %cst_17 = arith.constant 0.000000e+00 : f32
    %36 = vector.broadcast %cst_17 : f32 to vector<8x16xf32>
    %37 = arith.cmpf ogt, %35, %36 : vector<8x16xf32>
    %cst_18 = arith.constant 0.00999999977 : f32
    %38 = vector.broadcast %cst_18 : f32 to vector<8x16xf32>
    %39 = arith.mulf %38, %35 : vector<8x16xf32>
    %40 = arith.select %37, %35, %39 : vector<8x16xi1>, vector<8x16xf32>
    %cst_19 = arith.constant 0.000000e+00 : f32
    %41 = vector.broadcast %cst_19 : f32 to vector<8x4xf32>
    %42 = vector.extract_strided_slice %29 {offsets = [0, 0], sizes = [8, 12], strides = [1, 1]} : vector<8x16xf32> to vector<8x12xf32>
    %43 = tpu.concatenate %41, %42 in 1 : vector<8x4xf32>, vector<8x12xf32> -> vector<8x16xf32>
    %cst_20 = arith.constant 0.000000e+00 : f32
    %44 = vector.broadcast %cst_20 : f32 to vector<8x4xf32>
    %45 = vector.extract_strided_slice %40 {offsets = [0, 0], sizes = [8, 12], strides = [1, 1]} : vector<8x16xf32> to vector<8x12xf32>
    %46 = tpu.concatenate %44, %45 in 1 : vector<8x4xf32>, vector<8x12xf32> -> vector<8x16xf32>
    %47 = tpu.concatenate %43, %46 in 1 : vector<8x16xf32>, vector<8x16xf32> -> vector<8x32xf32>
    %cst_21 = arith.constant 0.000000e+00 : f32
    %48 = vector.broadcast %cst_21 : f32 to vector<8x3xf32>
    %49 = vector.extract_strided_slice %29 {offsets = [0, 0], sizes = [8, 13], strides = [1, 1]} : vector<8x16xf32> to vector<8x13xf32>
    %50 = tpu.concatenate %48, %49 in 1 : vector<8x3xf32>, vector<8x13xf32> -> vector<8x16xf32>
    %cst_22 = arith.constant 0.000000e+00 : f32
    %51 = vector.broadcast %cst_22 : f32 to vector<8x3xf32>
    %52 = vector.extract_strided_slice %40 {offsets = [0, 0], sizes = [8, 13], strides = [1, 1]} : vector<8x16xf32> to vector<8x13xf32>
    %53 = tpu.concatenate %51, %52 in 1 : vector<8x3xf32>, vector<8x13xf32> -> vector<8x16xf32>
    %54 = tpu.concatenate %50, %53 in 1 : vector<8x16xf32>, vector<8x16xf32> -> vector<8x32xf32>
    %cst_23 = arith.constant 0.000000e+00 : f32
    %55 = vector.broadcast %cst_23 : f32 to vector<8x2xf32>
    %56 = vector.extract_strided_slice %29 {offsets = [0, 0], sizes = [8, 14], strides = [1, 1]} : vector<8x16xf32> to vector<8x14xf32>
    %57 = tpu.concatenate %55, %56 in 1 : vector<8x2xf32>, vector<8x14xf32> -> vector<8x16xf32>
    %cst_24 = arith.constant 0.000000e+00 : f32
    %58 = vector.broadcast %cst_24 : f32 to vector<8x2xf32>
    %59 = vector.extract_strided_slice %40 {offsets = [0, 0], sizes = [8, 14], strides = [1, 1]} : vector<8x16xf32> to vector<8x14xf32>
    %60 = tpu.concatenate %58, %59 in 1 : vector<8x2xf32>, vector<8x14xf32> -> vector<8x16xf32>
    %61 = tpu.concatenate %57, %60 in 1 : vector<8x16xf32>, vector<8x16xf32> -> vector<8x32xf32>
    %cst_25 = arith.constant 0.000000e+00 : f32
    %62 = vector.broadcast %cst_25 : f32 to vector<8x1xf32>
    %63 = vector.extract_strided_slice %29 {offsets = [0, 0], sizes = [8, 15], strides = [1, 1]} : vector<8x16xf32> to vector<8x15xf32>
    %64 = tpu.concatenate %62, %63 in 1 : vector<8x1xf32>, vector<8x15xf32> -> vector<8x16xf32>
    %cst_26 = arith.constant 0.000000e+00 : f32
    %65 = vector.broadcast %cst_26 : f32 to vector<8x1xf32>
    %66 = vector.extract_strided_slice %40 {offsets = [0, 0], sizes = [8, 15], strides = [1, 1]} : vector<8x16xf32> to vector<8x15xf32>
    %67 = tpu.concatenate %65, %66 in 1 : vector<8x1xf32>, vector<8x15xf32> -> vector<8x16xf32>
    %68 = tpu.concatenate %64, %67 in 1 : vector<8x16xf32>, vector<8x16xf32> -> vector<8x32xf32>
    %69 = tpu.concatenate %29, %40 in 1 : vector<8x16xf32>, vector<8x16xf32> -> vector<8x32xf32>
    %cst_27 = arith.constant 0.000000e+00 : f32
    %70 = vector.broadcast %cst_27 : f32 to vector<8x1xf32>
    %71 = vector.extract_strided_slice %29 {offsets = [0, 1], sizes = [8, 15], strides = [1, 1]} : vector<8x16xf32> to vector<8x15xf32>
    %72 = tpu.concatenate %71, %70 in 1 : vector<8x15xf32>, vector<8x1xf32> -> vector<8x16xf32>
    %cst_28 = arith.constant 0.000000e+00 : f32
    %73 = vector.broadcast %cst_28 : f32 to vector<8x1xf32>
    %74 = vector.extract_strided_slice %40 {offsets = [0, 1], sizes = [8, 15], strides = [1, 1]} : vector<8x16xf32> to vector<8x15xf32>
    %75 = tpu.concatenate %74, %73 in 1 : vector<8x15xf32>, vector<8x1xf32> -> vector<8x16xf32>
    %76 = tpu.concatenate %72, %75 in 1 : vector<8x16xf32>, vector<8x16xf32> -> vector<8x32xf32>
    %cst_29 = arith.constant 0.000000e+00 : f32
    %77 = vector.broadcast %cst_29 : f32 to vector<8x2xf32>
    %78 = vector.extract_strided_slice %29 {offsets = [0, 2], sizes = [8, 14], strides = [1, 1]} : vector<8x16xf32> to vector<8x14xf32>
    %79 = tpu.concatenate %78, %77 in 1 : vector<8x14xf32>, vector<8x2xf32> -> vector<8x16xf32>
    %cst_30 = arith.constant 0.000000e+00 : f32
    %80 = vector.broadcast %cst_30 : f32 to vector<8x2xf32>
    %81 = vector.extract_strided_slice %40 {offsets = [0, 2], sizes = [8, 14], strides = [1, 1]} : vector<8x16xf32> to vector<8x14xf32>
    %82 = tpu.concatenate %81, %80 in 1 : vector<8x14xf32>, vector<8x2xf32> -> vector<8x16xf32>
    %83 = tpu.concatenate %79, %82 in 1 : vector<8x16xf32>, vector<8x16xf32> -> vector<8x32xf32>
    %cst_31 = arith.constant 0.000000e+00 : f32
    %84 = vector.broadcast %cst_31 : f32 to vector<8x3xf32>
    %85 = vector.extract_strided_slice %29 {offsets = [0, 3], sizes = [8, 13], strides = [1, 1]} : vector<8x16xf32> to vector<8x13xf32>
    %86 = tpu.concatenate %85, %84 in 1 : vector<8x13xf32>, vector<8x3xf32> -> vector<8x16xf32>
    %cst_32 = arith.constant 0.000000e+00 : f32
    %87 = vector.broadcast %cst_32 : f32 to vector<8x3xf32>
    %88 = vector.extract_strided_slice %40 {offsets = [0, 3], sizes = [8, 13], strides = [1, 1]} : vector<8x16xf32> to vector<8x13xf32>
    %89 = tpu.concatenate %88, %87 in 1 : vector<8x13xf32>, vector<8x3xf32> -> vector<8x16xf32>
    %90 = tpu.concatenate %86, %89 in 1 : vector<8x16xf32>, vector<8x16xf32> -> vector<8x32xf32>
    %cst_33 = arith.constant 0.000000e+00 : f32
    %91 = vector.broadcast %cst_33 : f32 to vector<8x4xf32>
    %92 = vector.extract_strided_slice %29 {offsets = [0, 4], sizes = [8, 12], strides = [1, 1]} : vector<8x16xf32> to vector<8x12xf32>
    %93 = tpu.concatenate %92, %91 in 1 : vector<8x12xf32>, vector<8x4xf32> -> vector<8x16xf32>
    %cst_34 = arith.constant 0.000000e+00 : f32
    %94 = vector.broadcast %cst_34 : f32 to vector<8x4xf32>
    %95 = vector.extract_strided_slice %40 {offsets = [0, 4], sizes = [8, 12], strides = [1, 1]} : vector<8x16xf32> to vector<8x12xf32>
    %96 = tpu.concatenate %95, %94 in 1 : vector<8x12xf32>, vector<8x4xf32> -> vector<8x16xf32>
    %97 = tpu.concatenate %93, %96 in 1 : vector<8x16xf32>, vector<8x16xf32> -> vector<8x32xf32>
    %98 = tpu.concatenate %47, %54, %61, %68, %69, %76, %83, %90, %97 in 0 : vector<8x32xf32>, vector<8x32xf32>, vector<8x32xf32>, vector<8x32xf32>, vector<8x32xf32>, vector<8x32xf32>, vector<8x32xf32>, vector<8x32xf32>, vector<8x32xf32> -> vector<72x32xf32>
    %c0_35 = arith.constant 0 : index
    %c0_36 = arith.constant 0 : index
    %99 = vector.load %arg5[%c0_35, %c0_36] : memref<8x72xf32, #tpu.memory_space<vmem>>, vector<8x72xf32>
    %cst_37 = arith.constant dense<0.000000e+00> : vector<8x32xf32>
    %100 = tpu.matmul %99, %98, %cst_37 {dimension_numbers = #tpu.dot_dimension_numbers<[1], [0], [0], [1], [0, 0, 1, 1], [], []>} : vector<8x72xf32>, vector<72x32xf32>, vector<8x32xf32> -> vector<8x32xf32>
    %cst_38 = arith.constant dense<0.000000e+00> : vector<8xf32>
    %101 = vector.multi_reduction <add>, %100, %cst_38 [1] : vector<8x32xf32> to vector<8xf32>
    %102 = vector.shape_cast %101 : vector<8xf32> to vector<8x1xf32>
    %103 = arith.mulf %100, %100 : vector<8x32xf32>
    %cst_39 = arith.constant dense<0.000000e+00> : vector<8xf32>
    %104 = vector.multi_reduction <add>, %103, %cst_39 [1] : vector<8x32xf32> to vector<8xf32>
    %105 = vector.shape_cast %104 : vector<8xf32> to vector<8x1xf32>
    %c0_40 = arith.constant 0 : index
    %c0_41 = arith.constant 0 : index
    %106 = vector.load %arg7[%c0_40, %c0_41] : memref<8x2xf32, #tpu.memory_space<vmem>>, vector<8x2xf32>
    %107 = tpu.concatenate %102, %105 in 1 : vector<8x1xf32>, vector<8x1xf32> -> vector<8x2xf32>
    %108 = arith.addf %106, %107 : vector<8x2xf32>
    %c0_42 = arith.constant 0 : index
    %c0_43 = arith.constant 0 : index
    %109 = vector.load %arg7[%c0_42, %c0_43] : memref<8x2xf32, #tpu.memory_space<vmem>>, vector<8x2xf32>
    tpu.vector_store %arg7[%c0_42, %c0_43], %108 {strides = array<i32>} : memref<8x2xf32, #tpu.memory_space<vmem>>, vector<8x2xf32>,
    %110 = vector.extract_strided_slice %100 {offsets = [0, 0], sizes = [8, 16], strides = [1, 1]} : vector<8x32xf32> to vector<8x16xf32>
    %c0_44 = arith.constant 0 : index
    %c0_45 = arith.constant 0 : index
    %c0_46 = arith.constant 0 : index
    %111 = vector.load %arg6[%c0_44, %c0_45, %c0_46] : memref<2x8x16xf32, #tpu.memory_space<vmem>>, vector<1x8x16xf32>
    %112 = vector.shape_cast %111 : vector<1x8x16xf32> to vector<8x16xf32>
    %113 = vector.shape_cast %110 : vector<8x16xf32> to vector<1x8x16xf32>
    tpu.vector_store %arg6[%c0_44, %c0_45, %c0_46], %113 {strides = array<i32>} : memref<2x8x16xf32, #tpu.memory_space<vmem>>, vector<1x8x16xf32>,
    %114 = vector.extract_strided_slice %100 {offsets = [0, 16], sizes = [8, 16], strides = [1, 1]} : vector<8x32xf32> to vector<8x16xf32>
    %c1_47 = arith.constant 1 : index
    %c0_48 = arith.constant 0 : index
    %c0_49 = arith.constant 0 : index
    %115 = vector.load %arg6[%c1_47, %c0_48, %c0_49] : memref<2x8x16xf32, #tpu.memory_space<vmem>>, vector<1x8x16xf32>
    %116 = vector.shape_cast %115 : vector<1x8x16xf32> to vector<8x16xf32>
    %117 = vector.shape_cast %114 : vector<8x16xf32> to vector<1x8x16xf32>
    tpu.vector_store %arg6[%c1_47, %c0_48, %c0_49], %117 {strides = array<i32>} : memref<2x8x16xf32, #tpu.memory_space<vmem>>, vector<1x8x16xf32>,
    return
  }
  func.func @transform_0(%arg0: i32) -> (i32, i32, i32) {
    %c0_i32 = arith.constant 0 : i32
    %c0_i32_0 = arith.constant 0 : i32
    %c0_i32_1 = arith.constant 0 : i32
    return %arg0, %c0_i32, %c0_i32_0 : i32, i32, i32
  }
  func.func @transform_1(%arg0: i32) -> (i32, i32) {
    %c0_i32 = arith.constant 0 : i32
    %c0_i32_0 = arith.constant 0 : i32
    %c0_i32_1 = arith.constant 0 : i32
    return %c0_i32, %c0_i32_0 : i32, i32
  }
  func.func @transform_2(%arg0: i32) -> (i32, i32) {
    %c0_i32 = arith.constant 0 : i32
    %c0_i32_0 = arith.constant 0 : i32
    %c0_i32_1 = arith.constant 0 : i32
    return %c0_i32, %c0_i32_0 : i32, i32
  }
  func.func @transform_3(%arg0: i32) -> (i32, i32) {
    %c0_i32 = arith.constant 0 : i32
    %c0_i32_0 = arith.constant 0 : i32
    %c0_i32_1 = arith.constant 0 : i32
    return %c0_i32, %c0_i32_0 : i32, i32
  }
  func.func @transform_4(%arg0: i32) -> (i32, i32) {
    %c0_i32 = arith.constant 0 : i32
    %c0_i32_0 = arith.constant 0 : i32
    %c0_i32_1 = arith.constant 0 : i32
    return %c0_i32, %c0_i32_0 : i32, i32
  }
  func.func @transform_5(%arg0: i32) -> (i32, i32, i32) {
    %c0_i32 = arith.constant 0 : i32
    %c0_i32_0 = arith.constant 0 : i32
    %c0_i32_1 = arith.constant 0 : i32
    return %arg0, %c0_i32, %c0_i32_0 : i32, i32, i32
  }
  func.func @transform_6(%arg0: i32) -> (i32, i32) {
    %c0_i32 = arith.constant 0 : i32
    %c0_i32_0 = arith.constant 0 : i32
    %c0_i32_1 = arith.constant 0 : i32
    return %c0_i32, %c0_i32_0 : i32, i32
  }
}

module attributes {stable_mosaic.version = 11 : i64} {
  func.func @_affine_lrelu_kernel(%arg0: i32, %arg1: memref<2x8x16xf32, #tpu.memory_space<vmem>>, %arg2: memref<8x2xf32, #tpu.memory_space<vmem>>, %arg3: memref<8x1xf32, #tpu.memory_space<vmem>>, %arg4: memref<8x1xf32, #tpu.memory_space<vmem>>, %arg5: memref<2x8x16xf32, #tpu.memory_space<vmem>>) attributes {dimension_semantics = [#tpu.dimension_semantics<parallel>], iteration_bounds = array<i64: 1>, scalar_prefetch = 0 : i64, scratch_operands = 0 : i64, tpu.core_type = #tpu.core_type<tc>, window_params = [{transform_indices = @transform_0, window_bounds = array<i64: 2, 8, 16>}, {pipeline_mode = #tpu.pipeline_mode<synchronous>, transform_indices = @transform_1, window_bounds = array<i64: 8, 2>}, {pipeline_mode = #tpu.pipeline_mode<synchronous>, transform_indices = @transform_2, window_bounds = array<i64: 8, 1>}, {pipeline_mode = #tpu.pipeline_mode<synchronous>, transform_indices = @transform_3, window_bounds = array<i64: 8, 1>}, {transform_indices = @transform_4, window_bounds = array<i64: 2, 8, 16>}]} {
    %c0 = arith.constant 0 : index
    %c0_0 = arith.constant 0 : index
    %0 = vector.load %arg2[%c0, %c0_0] : memref<8x2xf32, #tpu.memory_space<vmem>>, vector<8x1xf32>
    %cst = arith.constant 3.125000e-02 : f32
    %1 = vector.broadcast %cst : f32 to vector<8x1xf32>
    %2 = arith.mulf %0, %1 : vector<8x1xf32>
    %c0_1 = arith.constant 0 : index
    %c1 = arith.constant 1 : index
    %3 = vector.load %arg2[%c0_1, %c1] : memref<8x2xf32, #tpu.memory_space<vmem>>, vector<8x1xf32>
    %cst_2 = arith.constant 3.125000e-02 : f32
    %4 = vector.broadcast %cst_2 : f32 to vector<8x1xf32>
    %5 = arith.mulf %3, %4 : vector<8x1xf32>
    %6 = arith.mulf %2, %2 : vector<8x1xf32>
    %7 = arith.subf %5, %6 : vector<8x1xf32>
    %c0_3 = arith.constant 0 : index
    %c0_4 = arith.constant 0 : index
    %8 = vector.load %arg3[%c0_3, %c0_4] : memref<8x1xf32, #tpu.memory_space<vmem>>, vector<8x1xf32>
    %cst_5 = arith.constant 9.99999974E-6 : f32
    %9 = vector.broadcast %cst_5 : f32 to vector<8x1xf32>
    %10 = arith.addf %7, %9 : vector<8x1xf32>
    %11 = math.rsqrt %10 : vector<8x1xf32>
    %12 = arith.mulf %8, %11 : vector<8x1xf32>
    %c0_6 = arith.constant 0 : index
    %c0_7 = arith.constant 0 : index
    %13 = vector.load %arg4[%c0_6, %c0_7] : memref<8x1xf32, #tpu.memory_space<vmem>>, vector<8x1xf32>
    %14 = arith.mulf %2, %12 : vector<8x1xf32>
    %15 = arith.subf %13, %14 : vector<8x1xf32>
    %c0_8 = arith.constant 0 : index
    %c0_9 = arith.constant 0 : index
    %c0_10 = arith.constant 0 : index
    %16 = vector.load %arg1[%c0_8, %c0_9, %c0_10] : memref<2x8x16xf32, #tpu.memory_space<vmem>>, vector<1x8x16xf32>
    %17 = vector.shape_cast %16 : vector<1x8x16xf32> to vector<8x16xf32>
    %18 = vector.broadcast %12 : vector<8x1xf32> to vector<8x16xf32>
    %19 = arith.mulf %17, %18 : vector<8x16xf32>
    %20 = vector.broadcast %15 : vector<8x1xf32> to vector<8x16xf32>
    %21 = arith.addf %19, %20 : vector<8x16xf32>
    %cst_11 = arith.constant 0.000000e+00 : f32
    %22 = vector.broadcast %cst_11 : f32 to vector<8x16xf32>
    %23 = arith.cmpf ogt, %21, %22 : vector<8x16xf32>
    %cst_12 = arith.constant 0.00999999977 : f32
    %24 = vector.broadcast %cst_12 : f32 to vector<8x16xf32>
    %25 = arith.mulf %24, %21 : vector<8x16xf32>
    %26 = arith.select %23, %21, %25 : vector<8x16xi1>, vector<8x16xf32>
    %c0_13 = arith.constant 0 : index
    %c0_14 = arith.constant 0 : index
    %c0_15 = arith.constant 0 : index
    %27 = vector.load %arg5[%c0_13, %c0_14, %c0_15] : memref<2x8x16xf32, #tpu.memory_space<vmem>>, vector<1x8x16xf32>
    %28 = vector.shape_cast %27 : vector<1x8x16xf32> to vector<8x16xf32>
    %29 = vector.shape_cast %26 : vector<8x16xf32> to vector<1x8x16xf32>
    tpu.vector_store %arg5[%c0_13, %c0_14, %c0_15], %29 {strides = array<i32>} : memref<2x8x16xf32, #tpu.memory_space<vmem>>, vector<1x8x16xf32>,
    %c1_16 = arith.constant 1 : index
    %c0_17 = arith.constant 0 : index
    %c0_18 = arith.constant 0 : index
    %30 = vector.load %arg1[%c1_16, %c0_17, %c0_18] : memref<2x8x16xf32, #tpu.memory_space<vmem>>, vector<1x8x16xf32>
    %31 = vector.shape_cast %30 : vector<1x8x16xf32> to vector<8x16xf32>
    %32 = vector.broadcast %12 : vector<8x1xf32> to vector<8x16xf32>
    %33 = arith.mulf %31, %32 : vector<8x16xf32>
    %34 = vector.broadcast %15 : vector<8x1xf32> to vector<8x16xf32>
    %35 = arith.addf %33, %34 : vector<8x16xf32>
    %cst_19 = arith.constant 0.000000e+00 : f32
    %36 = vector.broadcast %cst_19 : f32 to vector<8x16xf32>
    %37 = arith.cmpf ogt, %35, %36 : vector<8x16xf32>
    %cst_20 = arith.constant 0.00999999977 : f32
    %38 = vector.broadcast %cst_20 : f32 to vector<8x16xf32>
    %39 = arith.mulf %38, %35 : vector<8x16xf32>
    %40 = arith.select %37, %35, %39 : vector<8x16xi1>, vector<8x16xf32>
    %c1_21 = arith.constant 1 : index
    %c0_22 = arith.constant 0 : index
    %c0_23 = arith.constant 0 : index
    %41 = vector.load %arg5[%c1_21, %c0_22, %c0_23] : memref<2x8x16xf32, #tpu.memory_space<vmem>>, vector<1x8x16xf32>
    %42 = vector.shape_cast %41 : vector<1x8x16xf32> to vector<8x16xf32>
    %43 = vector.shape_cast %40 : vector<8x16xf32> to vector<1x8x16xf32>
    tpu.vector_store %arg5[%c1_21, %c0_22, %c0_23], %43 {strides = array<i32>} : memref<2x8x16xf32, #tpu.memory_space<vmem>>, vector<1x8x16xf32>,
    return
  }
  func.func @transform_0(%arg0: i32) -> (i32, i32, i32) {
    %c0_i32 = arith.constant 0 : i32
    %c0_i32_0 = arith.constant 0 : i32
    %c0_i32_1 = arith.constant 0 : i32
    return %arg0, %c0_i32, %c0_i32_0 : i32, i32, i32
  }
  func.func @transform_1(%arg0: i32) -> (i32, i32) {
    %c0_i32 = arith.constant 0 : i32
    %c0_i32_0 = arith.constant 0 : i32
    %c0_i32_1 = arith.constant 0 : i32
    return %c0_i32, %c0_i32_0 : i32, i32
  }
  func.func @transform_2(%arg0: i32) -> (i32, i32) {
    %c0_i32 = arith.constant 0 : i32
    %c0_i32_0 = arith.constant 0 : i32
    %c0_i32_1 = arith.constant 0 : i32
    return %c0_i32, %c0_i32_0 : i32, i32
  }
  func.func @transform_3(%arg0: i32) -> (i32, i32) {
    %c0_i32 = arith.constant 0 : i32
    %c0_i32_0 = arith.constant 0 : i32
    %c0_i32_1 = arith.constant 0 : i32
    return %c0_i32, %c0_i32_0 : i32, i32
  }
  func.func @transform_4(%arg0: i32) -> (i32, i32, i32) {
    %c0_i32 = arith.constant 0 : i32
    %c0_i32_0 = arith.constant 0 : i32
    %c0_i32_1 = arith.constant 0 : i32
    return %arg0, %c0_i32, %c0_i32_0 : i32, i32, i32
  }
}

</mosaic_0001>

<llo_original>
// kernel: up_forward.3
$region0: #{up_forward.3}
  #allocation0 [shape = 'u32[]', space=smem, size = 0x4, offset = 0x4, fixed_abs, tag = 'smem constant byte address 0x4 - core index']
  #allocation1 [shape = 'u32[144,128]{1,0:T(1,128)}', space=vmem, size = 0x12000, scoped, tag = 'internal scratch']
  %s0 = inlined_call_operand.vmem [shape: f32[2,8,16], index: 0, kind: input, shape index: {}]
  %s1 = inlined_call_operand.vmem [shape: f32[8,72], index: 1, kind: input, shape index: {}]
  %s2 = inlined_call_operand.vmem [shape: f32[2,8,16], index: 2, kind: output, shape index: {0}]
  %s3 = inlined_call_operand.vmem [shape: f32[8,2], index: 3, kind: output, shape index: {1}]
  %4 = xla_tuple %s2, %s3
  %s5 = sld [smem:[#allocation0]]
  $region30: #{up_forward.3} parent=0
    _
  %s7 = ssub.s32 1, %s5
  %s8 = scalar_select 0, %s7, %s5
  // Predicated region
  $region2: #{up_forward.3} parent=0 // pred_check
    _
  $region3: #{up_forward.3} parent=0 // pred_check_branch
    %10 = sbr.rel (0) target = $region5
  $region4: #{up_forward.3} parent=0 // pred_region
    _
  $region5: #{up_forward.3} parent=0 // pred_fallthru
    _
  // Predicated region
  $region6: #{up_forward.3} parent=0 // pred_check
    _
  $region7: #{up_forward.3} parent=0 // pred_check_branch
    %12 = sbr.rel (0) target = $region9
  $region8: #{up_forward.3} parent=0 // pred_region
    _
  $region9: #{up_forward.3} parent=0 // pred_fallthru
    _
  %p13 = scmp.eq.s32.totalorder 0, 0
  // Predicated region
  $region10: #{up_forward.3} parent=0 // pred_check
    %p14 = pneg %p13
  $region11: #{up_forward.3} parent=0 // pred_check_branch
    %16 = sbr.rel (%p14) target = $region13
  $region12: #{up_forward.3} parent=0 // pred_region
    %vm17 = vcmask 15360
    %18 = vst.msk [vmem:[%s3] sm:$0xff] %vm17, 0.0
  $region13: #{up_forward.3} parent=0 // pred_fallthru
    _
  %v19 = vld [vmem:[%s0] sm:$0xff]
  %s20 = scalar_lea.vmem %s0, 8
  %v21 = vld [vmem:[%s20] sm:$0xff]
  %23 = vrot.lane.b32.xlu0 %v19, 4
  %v24 = vpop.permute.xlu0 %23
  %vm26 = vcmask 31744
  %v27 = vsel %vm26, 0.0, %v24
  %29 = vrot.lane.b32.xlu0 %v21, 4
  %v30 = vpop.permute.xlu0 %29
  %v32 = vsel %vm26, 0.0, %v30
  %34 = vrot.lane.b32.xlu0 %v32, 16
  %v35 = vpop.permute.xlu0 %34
  %vm37 = vcmask 130048
  %v38 = vsel %vm37, %v27, %v35
  %39 = vrot.lane.b32.xlu0 %v19, 3
  %v40 = vpop.permute.xlu0 %39
  %vm42 = vcmask 23552
  %v43 = vsel %vm42, 0.0, %v40
  %44 = vrot.lane.b32.xlu0 %v21, 3
  %v45 = vpop.permute.xlu0 %44
  %v47 = vsel %vm42, 0.0, %v45
  %49 = vrot.lane.b32.xlu0 %v47, 16
  %v50 = vpop.permute.xlu0 %49
  %v52 = vsel %vm37, %v43, %v50
  %53 = vrot.lane.b32.xlu0 %v19, 2
  %v54 = vpop.permute.xlu0 %53
  %vm56 = vcmask 15360
  %v57 = vsel %vm56, 0.0, %v54
  %58 = vrot.lane.b32.xlu0 %v21, 2
  %v59 = vpop.permute.xlu0 %58
  %v61 = vsel %vm56, 0.0, %v59
  %63 = vrot.lane.b32.xlu0 %v61, 16
  %v64 = vpop.permute.xlu0 %63
  %v66 = vsel %vm37, %v57, %v64
  %67 = vrot.lane.b32.xlu0 %v19, 1
  %v68 = vpop.permute.xlu0 %67
  %vm70 = vcmask 7168
  %v71 = vsel %vm70, 0.0, %v68
  %72 = vrot.lane.b32.xlu0 %v21, 1
  %v73 = vpop.permute.xlu0 %72
  %v75 = vsel %vm70, 0.0, %v73
  %77 = vrot.lane.b32.xlu0 %v75, 16
  %v78 = vpop.permute.xlu0 %77
  %v80 = vsel %vm37, %v71, %v78
  %81 = vrot.lane.b32.xlu0 %v21, 16
  %v82 = vpop.permute.xlu0 %81
  %v84 = vsel %vm37, %v19, %v82
  %85 = vrot.lane.b32.xlu0 %v19, 127
  %v86 = vpop.permute.xlu0 %85
  %vm88 = vcmask 121856
  %v89 = vsel %vm88, %v86, 0.0
  %90 = vrot.lane.b32.xlu0 %v21, 127
  %v91 = vpop.permute.xlu0 %90
  %v93 = vsel %vm88, %v91, 0.0
  %95 = vrot.lane.b32.xlu0 %v93, 16
  %v96 = vpop.permute.xlu0 %95
  %v98 = vsel %vm37, %v89, %v96
  %99 = vrot.lane.b32.xlu0 %v19, 126
  %v100 = vpop.permute.xlu0 %99
  %vm102 = vcmask 113664
  %v103 = vsel %vm102, %v100, 0.0
  %104 = vrot.lane.b32.xlu0 %v21, 126
  %v105 = vpop.permute.xlu0 %104
  %v107 = vsel %vm102, %v105, 0.0
  %109 = vrot.lane.b32.xlu0 %v107, 16
  %v110 = vpop.permute.xlu0 %109
  %v112 = vsel %vm37, %v103, %v110
  %113 = vrot.lane.b32.xlu0 %v19, 125
  %v114 = vpop.permute.xlu0 %113
  %vm116 = vcmask 105472
  %v117 = vsel %vm116, %v114, 0.0
  %118 = vrot.lane.b32.xlu0 %v21, 125
  %v119 = vpop.permute.xlu0 %118
  %v121 = vsel %vm116, %v119, 0.0
  %123 = vrot.lane.b32.xlu0 %v121, 16
  %v124 = vpop.permute.xlu0 %123
  %v126 = vsel %vm37, %v117, %v124
  %127 = vrot.lane.b32.xlu0 %v19, 124
  %v128 = vpop.permute.xlu0 %127
  %vm130 = vcmask 97280
  %v131 = vsel %vm130, %v128, 0.0
  %132 = vrot.lane.b32.xlu0 %v21, 124
  %v133 = vpop.permute.xlu0 %132
  %v135 = vsel %vm130, %v133, 0.0
  %137 = vrot.lane.b32.xlu0 %v135, 16
  %v138 = vpop.permute.xlu0 %137
  %v140 = vsel %vm37, %v131, %v138
  %v141 = vld [vmem:[%s1] sm:$0xff]
  %vm142 = vcmask 588800
  %v144 = vsel %vm142, %v141, 0
  %146 = vmatprep.subr.mxu0 0.0
  %147 = vmatpush1.msra.mxu0 %v38
  %148 = vmatprep.subr.mxu0 0.0
  %149 = vmatpush1.msra.mxu0 %v52
  %150 = vmatprep.subr.mxu0 0.0
  %151 = vmatpush1.msra.mxu0 %v66
  %152 = vmatprep.subr.mxu0 0.0
  %153 = vmatpush1.msra.mxu0 %v80
  %154 = vmatprep.subr.mxu0 0.0
  %155 = vmatpush1.msra.mxu0 %v84
  %156 = vmatprep.subr.mxu0 0.0
  %157 = vmatpush1.msra.mxu0 %v98
  %158 = vmatprep.subr.mxu0 0.0
  %159 = vmatpush1.msra.mxu0 %v112
  %160 = vmatprep.subr.mxu0 0.0
  %161 = vmatpush1.msra.mxu0 %v126
  %162 = vmatprep.subr.mxu0 0.0
  %163 = vmatpush1.msra.mxu0 %v140
  %164 = vmatprep.subr.mxu0 0.0
  %165 = vmatpush1.msra.mxu0 0.0
  %166 = vmatprep.subr.mxu0 0.0
  %167 = vmatpush1.msra.mxu0 0.0
  %168 = vmatprep.subr.mxu0 0.0
  %169 = vmatpush1.msra.mxu0 0.0
  %170 = vmatprep.subr.mxu0 0.0
  %171 = vmatpush1.msra.mxu0 0.0
  %172 = vmatprep.subr.mxu0 0.0
  %173 = vmatpush1.msra.mxu0 0.0
  %174 = vmatprep.subr.mxu0 0.0
  %175 = vmatpush1.msra.mxu0 0.0
  %176 = vmatprep.subr.mxu0 0.0
  %177 = vmatpush1.msra.mxu0 0.0
  %178 = vmatprep.subr.mxu0 0.0
  %179 = vmatpush1.msra.mxu0 0.0
  %180 = vmatprep.subr.mxu0 0.0
  %181 = vmatpush1.msra.mxu0 0.0
  %182 = vmatprep.subr.mxu0 0.0
  %183 = vmatpush1.msra.mxu0 0.0
  %184 = vmatprep.subr.mxu0 0.0
  %185 = vmatpush1.msra.mxu0 0.0
  %186 = vmatprep.subr.mxu0 0.0
  %187 = vmatpush1.msra.mxu0 0.0
  %188 = vmatprep.subr.mxu0 0.0
  %189 = vmatpush1.msra.mxu0 0.0
  %190 = vmatprep.subr.mxu0 0.0
  %191 = vmatpush1.msra.mxu0 0.0
  %192 = vmatprep.subr.mxu0 0.0
  %193 = vmatpush1.msra.mxu0 0.0
  %194 = vmatprep.subr.mxu0 0.0
  %195 = vmatpush1.msra.mxu0 0.0
  %196 = vmatprep.subr.mxu0 0.0
  %197 = vmatpush1.msra.mxu0 0.0
  %198 = vmatprep.subr.mxu0 0.0
  %199 = vmatpush1.msra.mxu0 0.0
  %200 = vmatprep.subr.mxu0 0.0
  %201 = vmatpush1.msra.mxu0 0.0
  %202 = vmatprep.subr.mxu0 0.0
  %203 = vmatpush1.msra.mxu0 0.0
  %204 = vmatprep.subr.mxu0 0.0
  %205 = vmatpush1.msra.mxu0 0.0
  %206 = vmatprep.subr.mxu0 0.0
  %207 = vmatpush1.msra.mxu0 0.0
  %208 = vmatprep.subr.mxu0 0.0
  %209 = vmatpush1.msra.mxu0 0.0
  %210 = vmatprep.mubr.f32.mxu0 0.0
  %211 = vmatmul.mubr.f32.gmra.mrb[0].mxu0 %v144
  %v212 = vpop.f32.mrb[0].mxu0
  %v213 = vadd.f32 0.0, %v212
  %v214 = vpop.f32.mrb[0].mxu0
  %215 = vdwg.mxu0
  %vm216 = vcmask 261120
  %v217 = vsel %vm216, %v213, 0.0
  %218 = vadd.xlane.f32.xlu0 %v217
  %v219 = vpop.xlane.xlu0 %218
  %v220 = vmul.f32 %v213, %v213
  %v221 = vsel %vm216, %v220, 0.0
  %222 = vadd.xlane.f32.xlu0 %v221
  %v223 = vpop.xlane.xlu0 %222
  %v224 = vld [vmem:[%s3] sm:$0xff]
  %v225 = vsel %vm70, %v219, %v223
  %v226 = vadd.f32 %v224, %v225
  %227 = vst.msk [vmem:[%s3] sm:$0xff] %vm56, %v226
  %228 = vst.msk [vmem:[%s2] sm:$0xff] %vm37, %v213
  %230 = vrot.lane.b32.xlu0 %v213, 112
  %v231 = vpop.permute.xlu0 %230
  %s233 = scalar_lea.vmem %s2, 8
  %234 = vst.msk [vmem:[%s233] sm:$0xff] %vm37, %v231
  // Predicated region
  $region14: #{up_forward.3} parent=0 // pred_check
    _
  $region15: #{up_forward.3} parent=0 // pred_check_branch
    %236 = sbr.rel (0) target = $region17
  $region16: #{up_forward.3} parent=0 // pred_region
    _
  $region17: #{up_forward.3} parent=0 // pred_fallthru
    _
  // Predicated region
  $region18: #{up_forward.3} parent=0 // pred_check
    _
  $region19: #{up_forward.3} parent=0 // pred_check_branch
    %238 = sbr.rel (0) target = $region21
  $region20: #{up_forward.3} parent=0 // pred_region
    _
  $region21: #{up_forward.3} parent=0 // pred_fallthru
    _
  // Predicated region
  $region22: #{up_forward.3} parent=0 // pred_check
    _
  $region23: #{up_forward.3} parent=0 // pred_check_branch
    %240 = sbr.rel (0) target = $region25
  $region24: #{up_forward.3} parent=0 // pred_region
    _
  $region25: #{up_forward.3} parent=0 // pred_fallthru
    _
  // Predicated region
  $region26: #{up_forward.3} parent=0 // pred_check
    _
  $region27: #{up_forward.3} parent=0 // pred_check_branch
    %242 = sbr.rel (0) target = $region29
  $region28: #{up_forward.3} parent=0 // pred_region
    _
  $region29: #{up_forward.3} parent=0 // pred_fallthru
    _

// kernel: up_forward.5
$region0: #{up_forward.5}
  #allocation0 [shape = 'u32[]', space=smem, size = 0x4, offset = 0x4, fixed_abs, tag = 'smem constant byte address 0x4 - core index']
  #allocation1 [shape = 'u32[144,128]{1,0:T(1,128)}', space=vmem, size = 0x12000, scoped, tag = 'internal scratch']
  %s0 = inlined_call_operand.vmem [shape: f32[2,8,16], index: 0, kind: input, shape index: {}]
  %s1 = inlined_call_operand.vmem [shape: f32[8,2], index: 1, kind: input, shape index: {}]
  %s2 = inlined_call_operand.vmem [shape: f32[8,1], index: 2, kind: input, shape index: {}]
  %s3 = inlined_call_operand.vmem [shape: f32[8,1], index: 3, kind: input, shape index: {}]
  %s4 = inlined_call_operand.hbm [shape: f32[2,8,16], index: 4, kind: output, shape index: {}]
  %s5 = sld [smem:[#allocation0]]
  $region26: #{up_forward.5} parent=0
    _
  %s7 = ssub.s32 1, %s5
  %s8 = scalar_select 0, %s7, %s5
  $region1: #{up_forward.5} parent=0
    #allocation2 [shape = 'u8[8192]{0}', space=vmem, size = 0x2000, scoped, tag = 'output window, operand 0, single buffered']
    #allocation3 [shape = 's32[1]{0}', space=sflag, size = 0x4, scoped, tag = 'scoped memory for up_forward.5']
    %9 = vsyncpa [#allocation3], 0
    // Predicated region
    $region2: #{up_forward.5} parent=1 // pred_check
      _
    $region3: #{up_forward.5} parent=1 // pred_check_branch
      %11 = sbr.rel (0) target = $region5
    $region4: #{up_forward.5} parent=1 // pred_region
      _
    $region5: #{up_forward.5} parent=1 // pred_fallthru
      _
    // Predicated region
    $region6: #{up_forward.5} parent=1 // pred_check
      _
    $region7: #{up_forward.5} parent=1 // pred_check_branch
      %13 = sbr.rel (0) target = $region9
    $region8: #{up_forward.5} parent=1 // pred_region
      _
    $region9: #{up_forward.5} parent=1 // pred_fallthru
      _
    // Predicated region
    $region10: #{up_forward.5} parent=1 // pred_check
      _
    $region11: #{up_forward.5} parent=1 // pred_check_branch
      %15 = sbr.rel (0) target = $region13
    $region12: #{up_forward.5} parent=1 // pred_region
      _
    $region13: #{up_forward.5} parent=1 // pred_fallthru
      _
    // Predicated region
    $region14: #{up_forward.5} parent=1 // pred_check
      _
    $region15: #{up_forward.5} parent=1 // pred_check_branch
      %17 = sbr.rel (0) target = $region17
    $region16: #{up_forward.5} parent=1 // pred_region
      _
    $region17: #{up_forward.5} parent=1 // pred_fallthru
      _
    %v18 = vld [vmem:[%s1] sm:$0xff]
    %v19 = vmul.f32 %v18, 0.03125
    %v20 = vmul.f32 %v19, %v19
    %22 = vrot.lane.b32.xlu0 %v20, 1
    %v23 = vpop.permute.xlu0 %22
    %v25 = vsub.f32 %v19, %v23
    %v26 = vld [vmem:[%s2] sm:$0xff]
    %v27 = vadd.f32 %v25, 1e-05
    %v28 = vrsqrt.pop %v27
    %30 = vrot.lane.b32.xlu0 %v28, 127
    %v31 = vpop.permute.xlu0 %30
    %v33 = vmul.f32 %v26, %v31
    %v34 = vld [vmem:[%s3] sm:$0xff]
    %v35 = vmul.f32 %v19, %v33
    %v36 = vsub.f32 %v34, %v35
    %v37 = vld [vmem:[%s0] sm:$0xff]
    %39 = vset.pattern.permute.xlu0 0
    %40 = vperm.xlu0 %39, %v33
    %v41 = vpop.permute.xlu0 %40
    %v43 = vmul.f32 %v37, %v41
    %45 = vset.pattern.permute.xlu0 0
    %46 = vperm.xlu0 %45, %v36
    %v47 = vpop.permute.xlu0 %46
    %v49 = vadd.f32 %v43, %v47
    %vm50 = vcmp.gt.f32.partialorder %v49, 0.0
    %v51 = vmul.f32 %v49, 0.01
    %v52 = vsel %vm50, %v49, %v51
    %vm53 = vcmask 130048
    %54 = vst.msk [vmem:[#allocation2] sm:$0xff] %vm53, %v52
    %s55 = scalar_lea.vmem %s0, 8
    %v56 = vld [vmem:[%s55] sm:$0xff]
    %v57 = vmul.f32 %v56, %v41
    %v58 = vadd.f32 %v57, %v47
    %vm59 = vcmp.gt.f32.partialorder %v58, 0.0
    %v60 = vmul.f32 %v58, 0.01
    %v61 = vsel %vm59, %v58, %v60
    %s62 = scalar_lea.vmem [#allocation2], 8
    %63 = vst.msk [vmem:[%s62] sm:$0xff] %vm53, %v61
    // Predicated region
    $region18: #{up_forward.5} parent=1 // pred_check
      _
    $region19: #{up_forward.5} parent=1 // pred_check_branch
      %65 = sbr.rel (0) target = $region21
    $region20: #{up_forward.5} parent=1 // pred_region
      %s67 = ssub.s32 256, 256
      %68 = vsyncadd [#allocation3], %s67
      %s69 = sshll.u32 [#allocation2], 4
      %s70 = int_to_ptr.vmem [resolvable:$true] %s69
      %75 = dma.vmem_to_hbm [thread:$0]  %s70, 256, %s4, [#allocation3], 128, 128, 8
    $region21: #{up_forward.5} parent=1 // pred_fallthru
      _
    // Predicated region
    $region22: #{up_forward.5} parent=1 // pred_check
      _
    $region23: #{up_forward.5} parent=1 // pred_check_branch
      %77 = sbr.rel (0) target = $region25
    $region24: #{up_forward.5} parent=1 // pred_region
      %78 = dma.done [#allocation3], 256
    $region25: #{up_forward.5} parent=1 // pred_fallthru
      _
    %79 = vsyncpa [#allocation3], 1

// kernel: up_forward.4
$region0: #{up_forward.4}
  #allocation0 [shape = 'u32[]', space=smem, size = 0x4, offset = 0x4, fixed_abs, tag = 'smem constant byte address 0x4 - core index']
  #allocation1 [shape = 'u32[144,128]{1,0:T(1,128)}', space=vmem, size = 0x12000, scoped, tag = 'internal scratch']
  %s0 = inlined_call_operand.vmem [shape: f32[2,8,16], index: 0, kind: input, shape index: {}]
  %s1 = inlined_call_operand.vmem [shape: f32[8,2], index: 1, kind: input, shape index: {}]
  %s2 = inlined_call_operand.vmem [shape: f32[8,1], index: 2, kind: input, shape index: {}]
  %s3 = inlined_call_operand.vmem [shape: f32[8,1], index: 3, kind: input, shape index: {}]
  %s4 = inlined_call_operand.vmem [shape: f32[8,72], index: 4, kind: input, shape index: {}]
  %s5 = inlined_call_operand.vmem [shape: f32[2,8,16], index: 5, kind: output, shape index: {0}]
  %s6 = inlined_call_operand.vmem [shape: f32[8,2], index: 6, kind: output, shape index: {1}]
  %7 = xla_tuple %s5, %s6
  %s8 = sld [smem:[#allocation0]]
  $region42: #{up_forward.4} parent=0
    _
  %s10 = ssub.s32 1, %s8
  %s11 = scalar_select 0, %s10, %s8
  // Predicated region
  $region2: #{up_forward.4} parent=0 // pred_check
    _
  $region3: #{up_forward.4} parent=0 // pred_check_branch
    %13 = sbr.rel (0) target = $region5
  $region4: #{up_forward.4} parent=0 // pred_region
    _
  $region5: #{up_forward.4} parent=0 // pred_fallthru
    _
  // Predicated region
  $region6: #{up_forward.4} parent=0 // pred_check
    _
  $region7: #{up_forward.4} parent=0 // pred_check_branch
    %15 = sbr.rel (0) target = $region9
  $region8: #{up_forward.4} parent=0 // pred_region
    _
  $region9: #{up_forward.4} parent=0 // pred_fallthru
    _
  // Predicated region
  $region10: #{up_forward.4} parent=0 // pred_check
    _
  $region11: #{up_forward.4} parent=0 // pred_check_branch
    %17 = sbr.rel (0) target = $region13
  $region12: #{up_forward.4} parent=0 // pred_region
    _
  $region13: #{up_forward.4} parent=0 // pred_fallthru
    _
  // Predicated region
  $region14: #{up_forward.4} parent=0 // pred_check
    _
  $region15: #{up_forward.4} parent=0 // pred_check_branch
    %19 = sbr.rel (0) target = $region17
  $region16: #{up_forward.4} parent=0 // pred_region
    _
  $region17: #{up_forward.4} parent=0 // pred_fallthru
    _
  // Predicated region
  $region18: #{up_forward.4} parent=0 // pred_check
    _
  $region19: #{up_forward.4} parent=0 // pred_check_branch
    %21 = sbr.rel (0) target = $region21
  $region20: #{up_forward.4} parent=0 // pred_region
    _
  $region21: #{up_forward.4} parent=0 // pred_fallthru
    _
  %p22 = scmp.eq.s32.totalorder 0, 0
  // Predicated region
  $region22: #{up_forward.4} parent=0 // pred_check
    %p23 = pneg %p22
  $region23: #{up_forward.4} parent=0 // pred_check_branch
    %25 = sbr.rel (%p23) target = $region25
  $region24: #{up_forward.4} parent=0 // pred_region
    %vm26 = vcmask 15360
    %27 = vst.msk [vmem:[%s6] sm:$0xff] %vm26, 0.0
  $region25: #{up_forward.4} parent=0 // pred_fallthru
    _
  %v28 = vld [vmem:[%s1] sm:$0xff]
  %v29 = vmul.f32 %v28, 0.03125
  %v30 = vmul.f32 %v29, %v29
  %32 = vrot.lane.b32.xlu0 %v30, 1
  %v33 = vpop.permute.xlu0 %32
  %v35 = vsub.f32 %v29, %v33
  %v36 = vld [vmem:[%s2] sm:$0xff]
  %v37 = vadd.f32 %v35, 1e-05
  %v38 = vrsqrt.pop %v37
  %40 = vrot.lane.b32.xlu0 %v38, 127
  %v41 = vpop.permute.xlu0 %40
  %v43 = vmul.f32 %v36, %v41
  %v44 = vld [vmem:[%s3] sm:$0xff]
  %v45 = vmul.f32 %v29, %v43
  %v46 = vsub.f32 %v44, %v45
  %v47 = vld [vmem:[%s0] sm:$0xff]
  %49 = vset.pattern.permute.xlu0 0
  %50 = vperm.xlu0 %49, %v43
  %v51 = vpop.permute.xlu0 %50
  %v53 = vmul.f32 %v47, %v51
  %55 = vset.pattern.permute.xlu0 0
  %56 = vperm.xlu0 %55, %v46
  %v57 = vpop.permute.xlu0 %56
  %v59 = vadd.f32 %v53, %v57
  %vm60 = vcmp.gt.f32.partialorder %v59, 0.0
  %v61 = vmul.f32 %v59, 0.01
  %v62 = vsel %vm60, %v59, %v61
  %s63 = scalar_lea.vmem %s0, 8
  %v64 = vld [vmem:[%s63] sm:$0xff]
  %v65 = vmul.f32 %v64, %v51
  %v66 = vadd.f32 %v65, %v57
  %vm67 = vcmp.gt.f32.partialorder %v66, 0.0
  %v68 = vmul.f32 %v66, 0.01
  %v69 = vsel %vm67, %v66, %v68
  %71 = vrot.lane.b32.xlu0 %v62, 4
  %v72 = vpop.permute.xlu0 %71
  %vm74 = vcmask 31744
  %v75 = vsel %vm74, 0.0, %v72
  %77 = vrot.lane.b32.xlu0 %v69, 4
  %v78 = vpop.permute.xlu0 %77
  %v80 = vsel %vm74, 0.0, %v78
  %82 = vrot.lane.b32.xlu0 %v80, 16
  %v83 = vpop.permute.xlu0 %82
  %vm85 = vcmask 130048
  %v86 = vsel %vm85, %v75, %v83
  %87 = vrot.lane.b32.xlu0 %v62, 3
  %v88 = vpop.permute.xlu0 %87
  %vm90 = vcmask 23552
  %v91 = vsel %vm90, 0.0, %v88
  %92 = vrot.lane.b32.xlu0 %v69, 3
  %v93 = vpop.permute.xlu0 %92
  %v95 = vsel %vm90, 0.0, %v93
  %97 = vrot.lane.b32.xlu0 %v95, 16
  %v98 = vpop.permute.xlu0 %97
  %v100 = vsel %vm85, %v91, %v98
  %101 = vrot.lane.b32.xlu0 %v62, 2
  %v102 = vpop.permute.xlu0 %101
  %vm104 = vcmask 15360
  %v105 = vsel %vm104, 0.0, %v102
  %106 = vrot.lane.b32.xlu0 %v69, 2
  %v107 = vpop.permute.xlu0 %106
  %v109 = vsel %vm104, 0.0, %v107
  %111 = vrot.lane.b32.xlu0 %v109, 16
  %v112 = vpop.permute.xlu0 %111
  %v114 = vsel %vm85, %v105, %v112
  %115 = vrot.lane.b32.xlu0 %v62, 1
  %v116 = vpop.permute.xlu0 %115
  %vm118 = vcmask 7168
  %v119 = vsel %vm118, 0.0, %v116
  %120 = vrot.lane.b32.xlu0 %v69, 1
  %v121 = vpop.permute.xlu0 %120
  %v123 = vsel %vm118, 0.0, %v121
  %125 = vrot.lane.b32.xlu0 %v123, 16
  %v126 = vpop.permute.xlu0 %125
  %v128 = vsel %vm85, %v119, %v126
  %129 = vrot.lane.b32.xlu0 %v69, 16
  %v130 = vpop.permute.xlu0 %129
  %v132 = vsel %vm85, %v62, %v130
  %133 = vrot.lane.b32.xlu0 %v62, 127
  %v134 = vpop.permute.xlu0 %133
  %vm136 = vcmask 121856
  %v137 = vsel %vm136, %v134, 0.0
  %138 = vrot.lane.b32.xlu0 %v69, 127
  %v139 = vpop.permute.xlu0 %138
  %v141 = vsel %vm136, %v139, 0.0
  %143 = vrot.lane.b32.xlu0 %v141, 16
  %v144 = vpop.permute.xlu0 %143
  %v146 = vsel %vm85, %v137, %v144
  %147 = vrot.lane.b32.xlu0 %v62, 126
  %v148 = vpop.permute.xlu0 %147
  %vm150 = vcmask 113664
  %v151 = vsel %vm150, %v148, 0.0
  %152 = vrot.lane.b32.xlu0 %v69, 126
  %v153 = vpop.permute.xlu0 %152
  %v155 = vsel %vm150, %v153, 0.0
  %157 = vrot.lane.b32.xlu0 %v155, 16
  %v158 = vpop.permute.xlu0 %157
  %v160 = vsel %vm85, %v151, %v158
  %161 = vrot.lane.b32.xlu0 %v62, 125
  %v162 = vpop.permute.xlu0 %161
  %vm164 = vcmask 105472
  %v165 = vsel %vm164, %v162, 0.0
  %166 = vrot.lane.b32.xlu0 %v69, 125
  %v167 = vpop.permute.xlu0 %166
  %v169 = vsel %vm164, %v167, 0.0
  %171 = vrot.lane.b32.xlu0 %v169, 16
  %v172 = vpop.permute.xlu0 %171
  %v174 = vsel %vm85, %v165, %v172
  %175 = vrot.lane.b32.xlu0 %v62, 124
  %v176 = vpop.permute.xlu0 %175
  %vm178 = vcmask 97280
  %v179 = vsel %vm178, %v176, 0.0
  %180 = vrot.lane.b32.xlu0 %v69, 124
  %v181 = vpop.permute.xlu0 %180
  %v183 = vsel %vm178, %v181, 0.0
  %185 = vrot.lane.b32.xlu0 %v183, 16
  %v186 = vpop.permute.xlu0 %185
  %v188 = vsel %vm85, %v179, %v186
  %v189 = vld [vmem:[%s4] sm:$0xff]
  %vm190 = vcmask 588800
  %v192 = vsel %vm190, %v189, 0
  %194 = vmatprep.subr.mxu0 0.0
  %195 = vmatpush1.msra.mxu0 %v86
  %196 = vmatprep.subr.mxu0 0.0
  %197 = vmatpush1.msra.mxu0 %v100
  %198 = vmatprep.subr.mxu0 0.0
  %199 = vmatpush1.msra.mxu0 %v114
  %200 = vmatprep.subr.mxu0 0.0
  %201 = vmatpush1.msra.mxu0 %v128
  %202 = vmatprep.subr.mxu0 0.0
  %203 = vmatpush1.msra.mxu0 %v132
  %204 = vmatprep.subr.mxu0 0.0
  %205 = vmatpush1.msra.mxu0 %v146
  %206 = vmatprep.subr.mxu0 0.0
  %207 = vmatpush1.msra.mxu0 %v160
  %208 = vmatprep.subr.mxu0 0.0
  %209 = vmatpush1.msra.mxu0 %v174
  %210 = vmatprep.subr.mxu0 0.0
  %211 = vmatpush1.msra.mxu0 %v188
  %212 = vmatprep.subr.mxu0 0.0
  %213 = vmatpush1.msra.mxu0 0.0
  %214 = vmatprep.subr.mxu0 0.0
  %215 = vmatpush1.msra.mxu0 0.0
  %216 = vmatprep.subr.mxu0 0.0
  %217 = vmatpush1.msra.mxu0 0.0
  %218 = vmatprep.subr.mxu0 0.0
  %219 = vmatpush1.msra.mxu0 0.0
  %220 = vmatprep.subr.mxu0 0.0
  %221 = vmatpush1.msra.mxu0 0.0
  %222 = vmatprep.subr.mxu0 0.0
  %223 = vmatpush1.msra.mxu0 0.0
  %224 = vmatprep.subr.mxu0 0.0
  %225 = vmatpush1.msra.mxu0 0.0
  %226 = vmatprep.subr.mxu0 0.0
  %227 = vmatpush1.msra.mxu0 0.0
  %228 = vmatprep.subr.mxu0 0.0
  %229 = vmatpush1.msra.mxu0 0.0
  %230 = vmatprep.subr.mxu0 0.0
  %231 = vmatpush1.msra.mxu0 0.0
  %232 = vmatprep.subr.mxu0 0.0
  %233 = vmatpush1.msra.mxu0 0.0
  %234 = vmatprep.subr.mxu0 0.0
  %235 = vmatpush1.msra.mxu0 0.0
  %236 = vmatprep.subr.mxu0 0.0
  %237 = vmatpush1.msra.mxu0 0.0
  %238 = vmatprep.subr.mxu0 0.0
  %239 = vmatpush1.msra.mxu0 0.0
  %240 = vmatprep.subr.mxu0 0.0
  %241 = vmatpush1.msra.mxu0 0.0
  %242 = vmatprep.subr.mxu0 0.0
  %243 = vmatpush1.msra.mxu0 0.0
  %244 = vmatprep.subr.mxu0 0.0
  %245 = vmatpush1.msra.mxu0 0.0
  %246 = vmatprep.subr.mxu0 0.0
  %247 = vmatpush1.msra.mxu0 0.0
  %248 = vmatprep.subr.mxu0 0.0
  %249 = vmatpush1.msra.mxu0 0.0
  %250 = vmatprep.subr.mxu0 0.0
  %251 = vmatpush1.msra.mxu0 0.0
  %252 = vmatprep.subr.mxu0 0.0
  %253 = vmatpush1.msra.mxu0 0.0
  %254 = vmatprep.subr.mxu0 0.0
  %255 = vmatpush1.msra.mxu0 0.0
  %256 = vmatprep.subr.mxu0 0.0
  %257 = vmatpush1.msra.mxu0 0.0
  %258 = vmatprep.mubr.f32.mxu0 0.0
  %259 = vmatmul.mubr.f32.gmra.mrb[0].mxu0 %v192
  %v260 = vpop.f32.mrb[0].mxu0
  %v261 = vadd.f32 0.0, %v260
  %v262 = vpop.f32.mrb[0].mxu0
  %263 = vdwg.mxu0
  %vm264 = vcmask 261120
  %v265 = vsel %vm264, %v261, 0.0
  %266 = vadd.xlane.f32.xlu0 %v265
  %v267 = vpop.xlane.xlu0 %266
  %v268 = vmul.f32 %v261, %v261
  %v269 = vsel %vm264, %v268, 0.0
  %270 = vadd.xlane.f32.xlu0 %v269
  %v271 = vpop.xlane.xlu0 %270
  %v272 = vld [vmem:[%s6] sm:$0xff]
  %v273 = vsel %vm118, %v267, %v271
  %v274 = vadd.f32 %v272, %v273
  %275 = vst.msk [vmem:[%s6] sm:$0xff] %vm104, %v274
  %276 = vst.msk [vmem:[%s5] sm:$0xff] %vm85, %v261
  %278 = vrot.lane.b32.xlu0 %v261, 112
  %v279 = vpop.permute.xlu0 %278
  %s281 = scalar_lea.vmem %s5, 8
  %282 = vst.msk [vmem:[%s281] sm:$0xff] %vm85, %v279
  // Predicated region
  $region26: #{up_forward.4} parent=0 // pred_check
    _
  $region27: #{up_forward.4} parent=0 // pred_check_branch
    %284 = sbr.rel (0) target = $region29
  $region28: #{up_forward.4} parent=0 // pred_region
    _
  $region29: #{up_forward.4} parent=0 // pred_fallthru
    _
  // Predicated region
  $region30: #{up_forward.4} parent=0 // pred_check
    _
  $region31: #{up_forward.4} parent=0 // pred_check_branch
    %286 = sbr.rel (0) target = $region33
  $region32: #{up_forward.4} parent=0 // pred_region
    _
  $region33: #{up_forward.4} parent=0 // pred_fallthru
    _
  // Predicated region
  $region34: #{up_forward.4} parent=0 // pred_check
    _
  $region35: #{up_forward.4} parent=0 // pred_check_branch
    %288 = sbr.rel (0) target = $region37
  $region36: #{up_forward.4} parent=0 // pred_region
    _
  $region37: #{up_forward.4} parent=0 // pred_fallthru
    _
  // Predicated region
  $region38: #{up_forward.4} parent=0 // pred_check
    _
  $region39: #{up_forward.4} parent=0 // pred_check_branch
    %290 = sbr.rel (0) target = $region41
  $region40: #{up_forward.4} parent=0 // pred_region
    _
  $region41: #{up_forward.4} parent=0 // pred_fallthru
    _

</llo_original>
